<compile_context>
chip_gen: v5e
topology: v5e:2x2
jax: 0.10.0
libtpu: 0.0.40
codegen_flags: <defaults>
</compile_context>

<pallas_src>
import functools

import jax
import jax.numpy as jnp
from jax.experimental import pallas as pl
from jax.experimental.pallas import tpu as pltpu


def _round_up(a: int, b: int) -> int:
    return (a + b - 1) // b * b


def _binary_conv_kernel(bw_ref, scale_ref, x_ref, o_ref, patch_ref, *,
                        k, Wp, Ho, Wo, Lpad):
    """One image of   out = (mean|W| * sign(W)) (*) x   (dense / stride-1 conv).

    bw_ref:    (O_pad, KKC_pad) bf16  sign(W), columns ordered (kh, kw, c), zero-padded
    scale_ref: (O_pad, 1)       f32   per-out-channel mean(|W|)
    x_ref:     (1, C, HpWp_pad) bf16  zero-padded image, rows flattened (row stride Wp)
    o_ref:     (1, O_pad, HoWo_pad) f32  output, flattened (row stride Wo)
    patch_ref: (KKC_pad, Lpad)  bf16  scratch: in-VMEM im2col patch matrix
    """
    C = x_ref.shape[1]
    KKC = k * k * C
    x0 = x_ref[0]                                     # (C, HpWp_pad) bf16

    # Zero the sublane-padding rows of the patch matrix every step (megacore
    # safe — not gated on program_id).  The matching weight columns are zero,
    # but uninitialized VMEM could hold NaNs and 0 * NaN = NaN.
    if patch_ref.shape[0] > KKC:
        patch_ref[KKC:, :] = jnp.zeros(
            (patch_ref.shape[0] - KKC, Lpad), patch_ref.dtype)

    # Build the im2col patch matrix in VMEM from k*k statically shifted views of
    # the row-flattened padded image: tap (kh, kw) lives at flat offset kh*Wp+kw.
    for kh in range(k):
        for kw in range(k):
            idx = kh * k + kw
            off = kh * Wp + kw
            patch_ref[idx * C:(idx + 1) * C, :] = x0[:, off:off + Lpad]

    # One MXU matmul per image: (O_pad, KKC_pad) @ (KKC_pad, Lpad), f32 accumulate.
    acc = jnp.dot(bw_ref[...], patch_ref[...], preferred_element_type=jnp.float32)
    acc = acc * scale_ref[...]                        # (O_pad, 1) broadcast, f32

    if o_ref.shape[2] != Ho * Wo:                     # zero output lane padding, if any
        o_ref[...] = jnp.zeros_like(o_ref)

    # Compact rows: flattened-padded position ho*Wp + wo  ->  ho*Wo + wo, so the
    # HBM store is already NCHW-flat and lane-dense (no post-kernel transpose).
    for ho in range(Ho):
        o_ref[0, :, ho * Wo:(ho + 1) * Wo] = (
            acc[:, ho * Wp: ho * Wp + Wo].astype(o_ref.dtype))


def hard_binary_conv(x, weights, *, out_chn, in_chn, kernel_size=3, stride=1,
                     padding=1):
    """Forward pass of HardBinaryConv.

    x:       (N, C, H, W)  float32, NCHW
    weights: (out_chn * in_chn * k * k, 1) float32 (as in the PyTorch module)
    returns: (N, out_chn, Ho, Wo) float32
    """
    N, C, H, W = x.shape
    k, s, p = kernel_size, stride, padding
    assert C == in_chn
    Hp, Wp = H + 2 * p, W + 2 * p
    # The kernel computes the dense (stride-1) output; stride > 1 subsamples after.
    Ho1, Wo1 = Hp - k + 1, Wp - k + 1
    assert Ho1 > 0 and Wo1 > 0
    Ho = (H + 2 * p - k) // s + 1
    Wo = (W + 2 * p - k) // s + 1

    # --- binarize weights once in the wrapper (tiny: out_chn*C*k*k elements) ---
    w4 = weights.reshape(out_chn, in_chn, k, k).astype(jnp.float32)
    scale = jnp.mean(jnp.abs(w4), axis=(1, 2, 3))                 # (O,)
    O_pad = _round_up(max(out_chn, 8), 8)
    KKC = k * k * C
    KKC_pad = _round_up(KKC, 16)                                  # bf16 sublane packing
    # Column order matches the in-kernel patch rows: (kh, kw, c).
    bw = jnp.transpose(jnp.sign(w4), (0, 2, 3, 1)).reshape(out_chn, KKC)
    bw = jnp.pad(bw, ((0, O_pad - out_chn), (0, KKC_pad - KKC))).astype(jnp.bfloat16)
    scale_p = jnp.pad(scale, (0, O_pad - out_chn)).reshape(O_pad, 1)

    # --- zero-pad spatially + row-flatten the input (one small XLA pass on x) ---
    Lpad = _round_up(Ho1 * Wp, 128)            # lane width of the per-image matmul
    max_off = (k - 1) * (Wp + 1)               # largest tap offset in flat coords
    HpWp_pad = _round_up(max_off + Lpad, 128)
    xflat = jnp.pad(x, ((0, 0), (0, 0), (p, p), (p, p))).reshape(N, C, Hp * Wp)
    xflat = jnp.pad(xflat, ((0, 0), (0, 0), (0, HpWp_pad - Hp * Wp))).astype(jnp.bfloat16)

    HoWo_pad = _round_up(Ho1 * Wo1, 128)

    # --- VMEM budget: keep well under v7x's 64 MiB physical / ~32 MiB scoped
    #     default and v5e's 16 MiB scoped default; raise the limit explicitly. ---
    vmem_bytes = (
        2 * C * HpWp_pad * 2                     # x block, double-buffered, bf16
        + 2 * O_pad * HoWo_pad * 4               # out block, double-buffered, f32
        + KKC_pad * Lpad * 2                     # patch scratch, bf16
        + O_pad * max(KKC_pad, 128) * 2          # resident sign(W)
        + O_pad * 128 * 4                        # resident scale
        + O_pad * Lpad * 4                       # f32 accumulator vregs
    )
    # TODO(synk): for very large feature maps, tile output rows within an image
    # instead of asserting (per-image granularity is enough for these shapes).
    assert vmem_bytes < 24 * 2**20, "per-image VMEM footprint too large; tile rows"
    vmem_limit = int(min(max(2 * vmem_bytes, 32 * 2**20), 48 * 2**20))

    flops = 2 * out_chn * KKC * N * Ho1 * Wo1
    bytes_accessed = xflat.size * 2 + bw.size * 2 + N * O_pad * HoWo_pad * 4

    kernel = functools.partial(_binary_conv_kernel,
                               k=k, Wp=Wp, Ho=Ho1, Wo=Wo1, Lpad=Lpad)

    out = pl.pallas_call(
        kernel,
        out_shape=jax.ShapeDtypeStruct((N, O_pad, HoWo_pad), jnp.float32),
        grid_spec=pltpu.PrefetchScalarGridSpec(
            num_scalar_prefetch=0,
            grid=(N,),
            in_specs=[
                pl.BlockSpec((O_pad, KKC_pad), lambda n: (0, 0)),      # VMEM-resident
                pl.BlockSpec((O_pad, 1), lambda n: (0, 0)),            # VMEM-resident
                # Streamed per image; bump to pipeline_mode=pl.Buffered(3) if the
                # profile ever shows exposed DMA at larger shapes.
                pl.BlockSpec((1, C, HpWp_pad), lambda n: (n, 0, 0)),
            ],
            out_specs=pl.BlockSpec((1, O_pad, HoWo_pad), lambda n: (n, 0, 0)),
            scratch_shapes=[pltpu.VMEM((KKC_pad, Lpad), jnp.bfloat16)],
        ),
        compiler_params=pltpu.CompilerParams(
            dimension_semantics=("parallel",),
            vmem_limit_bytes=vmem_limit,
        ),
        cost_estimate=pl.CostEstimate(
            flops=flops, transcendentals=0, bytes_accessed=bytes_accessed),
    )(bw, scale_p, xflat)

    out = out[:, :out_chn, :Ho1 * Wo1].reshape(N, out_chn, Ho1, Wo1)
    if s > 1:
        # TODO(synk): stride > 1 currently computes the dense (stride-1) result and
        # subsamples; an in-kernel strided gather would avoid the extra compute.
        out = out[:, :, ::s, ::s]
    assert out.shape == (N, out_chn, Ho, Wo)
    return out.astype(x.dtype)


def _reference(x, weights, *, out_chn, in_chn, kernel_size=3, stride=1, padding=1):
    """Plain-JAX reference matching the PyTorch forward semantics."""
    w = weights.reshape(out_chn, in_chn, kernel_size, kernel_size)
    scale = jnp.mean(jnp.abs(w), axis=(1, 2, 3), keepdims=True)
    bin_w = scale * jnp.sign(w)
    return jax.lax.conv_general_dilated(
        x, bin_w,
        window_strides=(stride, stride),
        padding=((padding, padding), (padding, padding)),
        dimension_numbers=("NCHW", "OIHW", "NCHW"),
    )


if __name__ == "__main__":
    key = jax.random.PRNGKey(0)
    kx, kwt = jax.random.split(key)

    in_chn, out_chn, kernel_size, stride, padding = 4, 8, 3, 1, 1
    N, H, W = 2, 16, 16

    x = jax.random.normal(kx, (N, in_chn, H, W), dtype=jnp.float32)
    # matches nn.Parameter(torch.rand((number_of_weights, 1)) * 0.001)
    n_weights = in_chn * out_chn * kernel_size * kernel_size
    weights = jax.random.uniform(kwt, (n_weights, 1), dtype=jnp.float32) * 0.001

    fwd = jax.jit(functools.partial(
        hard_binary_conv,
        out_chn=out_chn, in_chn=in_chn,
        kernel_size=kernel_size, stride=stride, padding=padding,
    ))
    y = fwd(x, weights)
    jax.block_until_ready(y)

    y_ref = _reference(
        x, weights,
        out_chn=out_chn, in_chn=in_chn,
        kernel_size=kernel_size, stride=stride, padding=padding,
    )
    assert y.shape == (N, out_chn, H, W), y.shape
    # Activations are fed to the MXU in bf16 (f32 accumulate), so tolerance is
    # loosened slightly vs the pure-f32 conv reference.
    max_err = float(jnp.max(jnp.abs(y - y_ref)))
    assert jnp.allclose(y, y_ref, atol=3e-4, rtol=3e-3), max_err

    print("KERNEL_OK")
</pallas_src>

<mosaic_0001>
module attributes {stable_mosaic.version = 11 : i64} {
  func.func @_binary_conv_kernel(%arg0: i32, %arg1: memref<8x48xbf16, #tpu.memory_space<vmem>>, %arg2: memref<8x1xf32, #tpu.memory_space<vmem>>, %arg3: memref<1x4x512xbf16, #tpu.memory_space<vmem>>, %arg4: memref<1x8x256xf32, #tpu.memory_space<vmem>>, %arg5: memref<48x384xbf16, #tpu.memory_space<vmem>>) attributes {dimension_semantics = [#tpu.dimension_semantics<parallel>], iteration_bounds = array<i64: 2>, scalar_prefetch = 0 : i64, scratch_operands = 1 : i64, tpu.core_type = #tpu.core_type<tc>, window_params = [{pipeline_mode = #tpu.pipeline_mode<synchronous>, transform_indices = @transform_0, window_bounds = array<i64: 8, 48>}, {pipeline_mode = #tpu.pipeline_mode<synchronous>, transform_indices = @transform_1, window_bounds = array<i64: 8, 1>}, {transform_indices = @transform_2, window_bounds = array<i64: 1, 4, 512>}, {transform_indices = @transform_3, window_bounds = array<i64: 1, 8, 256>}]} {
    %c0 = arith.constant 0 : index
    %c0_0 = arith.constant 0 : index
    %c0_1 = arith.constant 0 : index
    %0 = vector.load %arg3[%c0, %c0_0, %c0_1] : memref<1x4x512xbf16, #tpu.memory_space<vmem>>, vector<1x4x512xbf16>
    %1 = vector.shape_cast %0 : vector<1x4x512xbf16> to vector<4x512xbf16>
    %cst = arith.constant 0.000000e+00 : bf16
    %2 = vector.broadcast %cst : bf16 to vector<12x384xbf16>
    %c36 = arith.constant 36 : index
    %c0_2 = arith.constant 0 : index
    %3 = vector.load %arg5[%c36, %c0_2] : memref<48x384xbf16, #tpu.memory_space<vmem>>, vector<12x384xbf16>
    tpu.vector_store %arg5[%c36, %c0_2], %2 {strides = array<i32>} : memref<48x384xbf16, #tpu.memory_space<vmem>>, vector<12x384xbf16>,
    %4 = vector.extract_strided_slice %1 {offsets = [0, 0], sizes = [4, 384], strides = [1, 1]} : vector<4x512xbf16> to vector<4x384xbf16>
    %c0_3 = arith.constant 0 : index
    %c0_4 = arith.constant 0 : index
    %5 = vector.load %arg5[%c0_3, %c0_4] : memref<48x384xbf16, #tpu.memory_space<vmem>>, vector<4x384xbf16>
    tpu.vector_store %arg5[%c0_3, %c0_4], %4 {strides = array<i32>} : memref<48x384xbf16, #tpu.memory_space<vmem>>, vector<4x384xbf16>,
    %6 = vector.extract_strided_slice %1 {offsets = [0, 1], sizes = [4, 384], strides = [1, 1]} : vector<4x512xbf16> to vector<4x384xbf16>
    %c4 = arith.constant 4 : index
    %c0_5 = arith.constant 0 : index
    %7 = vector.load %arg5[%c4, %c0_5] : memref<48x384xbf16, #tpu.memory_space<vmem>>, vector<4x384xbf16>
    tpu.vector_store %arg5[%c4, %c0_5], %6 {strides = array<i32>} : memref<48x384xbf16, #tpu.memory_space<vmem>>, vector<4x384xbf16>,
    %8 = vector.extract_strided_slice %1 {offsets = [0, 2], sizes = [4, 384], strides = [1, 1]} : vector<4x512xbf16> to vector<4x384xbf16>
    %c8 = arith.constant 8 : index
    %c0_6 = arith.constant 0 : index
    %9 = vector.load %arg5[%c8, %c0_6] : memref<48x384xbf16, #tpu.memory_space<vmem>>, vector<4x384xbf16>
    tpu.vector_store %arg5[%c8, %c0_6], %8 {strides = array<i32>} : memref<48x384xbf16, #tpu.memory_space<vmem>>, vector<4x384xbf16>,
    %10 = vector.extract_strided_slice %1 {offsets = [0, 18], sizes = [4, 384], strides = [1, 1]} : vector<4x512xbf16> to vector<4x384xbf16>
    %c12 = arith.constant 12 : index
    %c0_7 = arith.constant 0 : index
    %11 = vector.load %arg5[%c12, %c0_7] : memref<48x384xbf16, #tpu.memory_space<vmem>>, vector<4x384xbf16>
    tpu.vector_store %arg5[%c12, %c0_7], %10 {strides = array<i32>} : memref<48x384xbf16, #tpu.memory_space<vmem>>, vector<4x384xbf16>,
    %12 = vector.extract_strided_slice %1 {offsets = [0, 19], sizes = [4, 384], strides = [1, 1]} : vector<4x512xbf16> to vector<4x384xbf16>
    %c16 = arith.constant 16 : index
    %c0_8 = arith.constant 0 : index
    %13 = vector.load %arg5[%c16, %c0_8] : memref<48x384xbf16, #tpu.memory_space<vmem>>, vector<4x384xbf16>
    tpu.vector_store %arg5[%c16, %c0_8], %12 {strides = array<i32>} : memref<48x384xbf16, #tpu.memory_space<vmem>>, vector<4x384xbf16>,
    %14 = vector.extract_strided_slice %1 {offsets = [0, 20], sizes = [4, 384], strides = [1, 1]} : vector<4x512xbf16> to vector<4x384xbf16>
    %c20 = arith.constant 20 : index
    %c0_9 = arith.constant 0 : index
    %15 = vector.load %arg5[%c20, %c0_9] : memref<48x384xbf16, #tpu.memory_space<vmem>>, vector<4x384xbf16>
    tpu.vector_store %arg5[%c20, %c0_9], %14 {strides = array<i32>} : memref<48x384xbf16, #tpu.memory_space<vmem>>, vector<4x384xbf16>,
    %16 = vector.extract_strided_slice %1 {offsets = [0, 36], sizes = [4, 384], strides = [1, 1]} : vector<4x512xbf16> to vector<4x384xbf16>
    %c24 = arith.constant 24 : index
    %c0_10 = arith.constant 0 : index
    %17 = vector.load %arg5[%c24, %c0_10] : memref<48x384xbf16, #tpu.memory_space<vmem>>, vector<4x384xbf16>
    tpu.vector_store %arg5[%c24, %c0_10], %16 {strides = array<i32>} : memref<48x384xbf16, #tpu.memory_space<vmem>>, vector<4x384xbf16>,
    %18 = vector.extract_strided_slice %1 {offsets = [0, 37], sizes = [4, 384], strides = [1, 1]} : vector<4x512xbf16> to vector<4x384xbf16>
    %c28 = arith.constant 28 : index
    %c0_11 = arith.constant 0 : index
    %19 = vector.load %arg5[%c28, %c0_11] : memref<48x384xbf16, #tpu.memory_space<vmem>>, vector<4x384xbf16>
    tpu.vector_store %arg5[%c28, %c0_11], %18 {strides = array<i32>} : memref<48x384xbf16, #tpu.memory_space<vmem>>, vector<4x384xbf16>,
    %20 = vector.extract_strided_slice %1 {offsets = [0, 38], sizes = [4, 384], strides = [1, 1]} : vector<4x512xbf16> to vector<4x384xbf16>
    %c32 = arith.constant 32 : index
    %c0_12 = arith.constant 0 : index
    %21 = vector.load %arg5[%c32, %c0_12] : memref<48x384xbf16, #tpu.memory_space<vmem>>, vector<4x384xbf16>
    tpu.vector_store %arg5[%c32, %c0_12], %20 {strides = array<i32>} : memref<48x384xbf16, #tpu.memory_space<vmem>>, vector<4x384xbf16>,
    %c0_13 = arith.constant 0 : index
    %c0_14 = arith.constant 0 : index
    %22 = vector.load %arg1[%c0_13, %c0_14] : memref<8x48xbf16, #tpu.memory_space<vmem>>, vector<8x48xbf16>
    %c0_15 = arith.constant 0 : index
    %c0_16 = arith.constant 0 : index
    %23 = vector.load %arg5[%c0_15, %c0_16] : memref<48x384xbf16, #tpu.memory_space<vmem>>, vector<48x384xbf16>
    %cst_17 = arith.constant dense<0.000000e+00> : vector<8x384xf32>
    %24 = tpu.matmul %22, %23, %cst_17 {dimension_numbers = #tpu.dot_dimension_numbers<[1], [0], [0], [1], [0, 0, 1, 1], [], []>} : vector<8x48xbf16>, vector<48x384xbf16>, vector<8x384xf32> -> vector<8x384xf32>
    %c0_18 = arith.constant 0 : index
    %c0_19 = arith.constant 0 : index
    %25 = vector.load %arg2[%c0_18, %c0_19] : memref<8x1xf32, #tpu.memory_space<vmem>>, vector<8x1xf32>
    %26 = vector.broadcast %25 : vector<8x1xf32> to vector<8x384xf32>
    %27 = arith.mulf %24, %26 : vector<8x384xf32>
    %28 = vector.extract_strided_slice %27 {offsets = [0, 0], sizes = [8, 16], strides = [1, 1]} : vector<8x384xf32> to vector<8x16xf32>
    %c0_20 = arith.constant 0 : index
    %c0_21 = arith.constant 0 : index
    %c0_22 = arith.constant 0 : index
    %29 = vector.load %arg4[%c0_20, %c0_21, %c0_22] : memref<1x8x256xf32, #tpu.memory_space<vmem>>, vector<1x8x16xf32>
    %30 = vector.shape_cast %29 : vector<1x8x16xf32> to vector<8x16xf32>
    %31 = vector.shape_cast %28 : vector<8x16xf32> to vector<1x8x16xf32>
    tpu.vector_store %arg4[%c0_20, %c0_21, %c0_22], %31 {strides = array<i32>} : memref<1x8x256xf32, #tpu.memory_space<vmem>>, vector<1x8x16xf32>,
    %32 = vector.extract_strided_slice %27 {offsets = [0, 18], sizes = [8, 16], strides = [1, 1]} : vector<8x384xf32> to vector<8x16xf32>
    %c0_23 = arith.constant 0 : index
    %c0_24 = arith.constant 0 : index
    %c16_25 = arith.constant 16 : index
    %33 = vector.load %arg4[%c0_23, %c0_24, %c16_25] : memref<1x8x256xf32, #tpu.memory_space<vmem>>, vector<1x8x16xf32>
    %34 = vector.shape_cast %33 : vector<1x8x16xf32> to vector<8x16xf32>
    %35 = vector.shape_cast %32 : vector<8x16xf32> to vector<1x8x16xf32>
    tpu.vector_store %arg4[%c0_23, %c0_24, %c16_25], %35 {strides = array<i32>} : memref<1x8x256xf32, #tpu.memory_space<vmem>>, vector<1x8x16xf32>,
    %36 = vector.extract_strided_slice %27 {offsets = [0, 36], sizes = [8, 16], strides = [1, 1]} : vector<8x384xf32> to vector<8x16xf32>
    %c0_26 = arith.constant 0 : index
    %c0_27 = arith.constant 0 : index
    %c32_28 = arith.constant 32 : index
    %37 = vector.load %arg4[%c0_26, %c0_27, %c32_28] : memref<1x8x256xf32, #tpu.memory_space<vmem>>, vector<1x8x16xf32>
    %38 = vector.shape_cast %37 : vector<1x8x16xf32> to vector<8x16xf32>
    %39 = vector.shape_cast %36 : vector<8x16xf32> to vector<1x8x16xf32>
    tpu.vector_store %arg4[%c0_26, %c0_27, %c32_28], %39 {strides = array<i32>} : memref<1x8x256xf32, #tpu.memory_space<vmem>>, vector<1x8x16xf32>,
    %40 = vector.extract_strided_slice %27 {offsets = [0, 54], sizes = [8, 16], strides = [1, 1]} : vector<8x384xf32> to vector<8x16xf32>
    %c0_29 = arith.constant 0 : index
    %c0_30 = arith.constant 0 : index
    %c48 = arith.constant 48 : index
    %41 = vector.load %arg4[%c0_29, %c0_30, %c48] : memref<1x8x256xf32, #tpu.memory_space<vmem>>, vector<1x8x16xf32>
    %42 = vector.shape_cast %41 : vector<1x8x16xf32> to vector<8x16xf32>
    %43 = vector.shape_cast %40 : vector<8x16xf32> to vector<1x8x16xf32>
    tpu.vector_store %arg4[%c0_29, %c0_30, %c48], %43 {strides = array<i32>} : memref<1x8x256xf32, #tpu.memory_space<vmem>>, vector<1x8x16xf32>,
    %44 = vector.extract_strided_slice %27 {offsets = [0, 72], sizes = [8, 16], strides = [1, 1]} : vector<8x384xf32> to vector<8x16xf32>
    %c0_31 = arith.constant 0 : index
    %c0_32 = arith.constant 0 : index
    %c64 = arith.constant 64 : index
    %45 = vector.load %arg4[%c0_31, %c0_32, %c64] : memref<1x8x256xf32, #tpu.memory_space<vmem>>, vector<1x8x16xf32>
    %46 = vector.shape_cast %45 : vector<1x8x16xf32> to vector<8x16xf32>
    %47 = vector.shape_cast %44 : vector<8x16xf32> to vector<1x8x16xf32>
    tpu.vector_store %arg4[%c0_31, %c0_32, %c64], %47 {strides = array<i32>} : memref<1x8x256xf32, #tpu.memory_space<vmem>>, vector<1x8x16xf32>,
    %48 = vector.extract_strided_slice %27 {offsets = [0, 90], sizes = [8, 16], strides = [1, 1]} : vector<8x384xf32> to vector<8x16xf32>
    %c0_33 = arith.constant 0 : index
    %c0_34 = arith.constant 0 : index
    %c80 = arith.constant 80 : index
    %49 = vector.load %arg4[%c0_33, %c0_34, %c80] : memref<1x8x256xf32, #tpu.memory_space<vmem>>, vector<1x8x16xf32>
    %50 = vector.shape_cast %49 : vector<1x8x16xf32> to vector<8x16xf32>
    %51 = vector.shape_cast %48 : vector<8x16xf32> to vector<1x8x16xf32>
    tpu.vector_store %arg4[%c0_33, %c0_34, %c80], %51 {strides = array<i32>} : memref<1x8x256xf32, #tpu.memory_space<vmem>>, vector<1x8x16xf32>,
    %52 = vector.extract_strided_slice %27 {offsets = [0, 108], sizes = [8, 16], strides = [1, 1]} : vector<8x384xf32> to vector<8x16xf32>
    %c0_35 = arith.constant 0 : index
    %c0_36 = arith.constant 0 : index
    %c96 = arith.constant 96 : index
    %53 = vector.load %arg4[%c0_35, %c0_36, %c96] : memref<1x8x256xf32, #tpu.memory_space<vmem>>, vector<1x8x16xf32>
    %54 = vector.shape_cast %53 : vector<1x8x16xf32> to vector<8x16xf32>
    %55 = vector.shape_cast %52 : vector<8x16xf32> to vector<1x8x16xf32>
    tpu.vector_store %arg4[%c0_35, %c0_36, %c96], %55 {strides = array<i32>} : memref<1x8x256xf32, #tpu.memory_space<vmem>>, vector<1x8x16xf32>,
    %56 = vector.extract_strided_slice %27 {offsets = [0, 126], sizes = [8, 16], strides = [1, 1]} : vector<8x384xf32> to vector<8x16xf32>
    %c0_37 = arith.constant 0 : index
    %c0_38 = arith.constant 0 : index
    %c112 = arith.constant 112 : index
    %57 = vector.load %arg4[%c0_37, %c0_38, %c112] : memref<1x8x256xf32, #tpu.memory_space<vmem>>, vector<1x8x16xf32>
    %58 = vector.shape_cast %57 : vector<1x8x16xf32> to vector<8x16xf32>
    %59 = vector.shape_cast %56 : vector<8x16xf32> to vector<1x8x16xf32>
    tpu.vector_store %arg4[%c0_37, %c0_38, %c112], %59 {strides = array<i32>} : memref<1x8x256xf32, #tpu.memory_space<vmem>>, vector<1x8x16xf32>,
    %60 = vector.extract_strided_slice %27 {offsets = [0, 144], sizes = [8, 16], strides = [1, 1]} : vector<8x384xf32> to vector<8x16xf32>
    %c0_39 = arith.constant 0 : index
    %c0_40 = arith.constant 0 : index
    %c128 = arith.constant 128 : index
    %61 = vector.load %arg4[%c0_39, %c0_40, %c128] : memref<1x8x256xf32, #tpu.memory_space<vmem>>, vector<1x8x16xf32>
    %62 = vector.shape_cast %61 : vector<1x8x16xf32> to vector<8x16xf32>
    %63 = vector.shape_cast %60 : vector<8x16xf32> to vector<1x8x16xf32>
    tpu.vector_store %arg4[%c0_39, %c0_40, %c128], %63 {strides = array<i32>} : memref<1x8x256xf32, #tpu.memory_space<vmem>>, vector<1x8x16xf32>,
    %64 = vector.extract_strided_slice %27 {offsets = [0, 162], sizes = [8, 16], strides = [1, 1]} : vector<8x384xf32> to vector<8x16xf32>
    %c0_41 = arith.constant 0 : index
    %c0_42 = arith.constant 0 : index
    %c144 = arith.constant 144 : index
    %65 = vector.load %arg4[%c0_41, %c0_42, %c144] : memref<1x8x256xf32, #tpu.memory_space<vmem>>, vector<1x8x16xf32>
    %66 = vector.shape_cast %65 : vector<1x8x16xf32> to vector<8x16xf32>
    %67 = vector.shape_cast %64 : vector<8x16xf32> to vector<1x8x16xf32>
    tpu.vector_store %arg4[%c0_41, %c0_42, %c144], %67 {strides = array<i32>} : memref<1x8x256xf32, #tpu.memory_space<vmem>>, vector<1x8x16xf32>,
    %68 = vector.extract_strided_slice %27 {offsets = [0, 180], sizes = [8, 16], strides = [1, 1]} : vector<8x384xf32> to vector<8x16xf32>
    %c0_43 = arith.constant 0 : index
    %c0_44 = arith.constant 0 : index
    %c160 = arith.constant 160 : index
    %69 = vector.load %arg4[%c0_43, %c0_44, %c160] : memref<1x8x256xf32, #tpu.memory_space<vmem>>, vector<1x8x16xf32>
    %70 = vector.shape_cast %69 : vector<1x8x16xf32> to vector<8x16xf32>
    %71 = vector.shape_cast %68 : vector<8x16xf32> to vector<1x8x16xf32>
    tpu.vector_store %arg4[%c0_43, %c0_44, %c160], %71 {strides = array<i32>} : memref<1x8x256xf32, #tpu.memory_space<vmem>>, vector<1x8x16xf32>,
    %72 = vector.extract_strided_slice %27 {offsets = [0, 198], sizes = [8, 16], strides = [1, 1]} : vector<8x384xf32> to vector<8x16xf32>
    %c0_45 = arith.constant 0 : index
    %c0_46 = arith.constant 0 : index
    %c176 = arith.constant 176 : index
    %73 = vector.load %arg4[%c0_45, %c0_46, %c176] : memref<1x8x256xf32, #tpu.memory_space<vmem>>, vector<1x8x16xf32>
    %74 = vector.shape_cast %73 : vector<1x8x16xf32> to vector<8x16xf32>
    %75 = vector.shape_cast %72 : vector<8x16xf32> to vector<1x8x16xf32>
    tpu.vector_store %arg4[%c0_45, %c0_46, %c176], %75 {strides = array<i32>} : memref<1x8x256xf32, #tpu.memory_space<vmem>>, vector<1x8x16xf32>,
    %76 = vector.extract_strided_slice %27 {offsets = [0, 216], sizes = [8, 16], strides = [1, 1]} : vector<8x384xf32> to vector<8x16xf32>
    %c0_47 = arith.constant 0 : index
    %c0_48 = arith.constant 0 : index
    %c192 = arith.constant 192 : index
    %77 = vector.load %arg4[%c0_47, %c0_48, %c192] : memref<1x8x256xf32, #tpu.memory_space<vmem>>, vector<1x8x16xf32>
    %78 = vector.shape_cast %77 : vector<1x8x16xf32> to vector<8x16xf32>
    %79 = vector.shape_cast %76 : vector<8x16xf32> to vector<1x8x16xf32>
    tpu.vector_store %arg4[%c0_47, %c0_48, %c192], %79 {strides = array<i32>} : memref<1x8x256xf32, #tpu.memory_space<vmem>>, vector<1x8x16xf32>,
    %80 = vector.extract_strided_slice %27 {offsets = [0, 234], sizes = [8, 16], strides = [1, 1]} : vector<8x384xf32> to vector<8x16xf32>
    %c0_49 = arith.constant 0 : index
    %c0_50 = arith.constant 0 : index
    %c208 = arith.constant 208 : index
    %81 = vector.load %arg4[%c0_49, %c0_50, %c208] : memref<1x8x256xf32, #tpu.memory_space<vmem>>, vector<1x8x16xf32>
    %82 = vector.shape_cast %81 : vector<1x8x16xf32> to vector<8x16xf32>
    %83 = vector.shape_cast %80 : vector<8x16xf32> to vector<1x8x16xf32>
    tpu.vector_store %arg4[%c0_49, %c0_50, %c208], %83 {strides = array<i32>} : memref<1x8x256xf32, #tpu.memory_space<vmem>>, vector<1x8x16xf32>,
    %84 = vector.extract_strided_slice %27 {offsets = [0, 252], sizes = [8, 16], strides = [1, 1]} : vector<8x384xf32> to vector<8x16xf32>
    %c0_51 = arith.constant 0 : index
    %c0_52 = arith.constant 0 : index
    %c224 = arith.constant 224 : index
    %85 = vector.load %arg4[%c0_51, %c0_52, %c224] : memref<1x8x256xf32, #tpu.memory_space<vmem>>, vector<1x8x16xf32>
    %86 = vector.shape_cast %85 : vector<1x8x16xf32> to vector<8x16xf32>
    %87 = vector.shape_cast %84 : vector<8x16xf32> to vector<1x8x16xf32>
    tpu.vector_store %arg4[%c0_51, %c0_52, %c224], %87 {strides = array<i32>} : memref<1x8x256xf32, #tpu.memory_space<vmem>>, vector<1x8x16xf32>,
    %88 = vector.extract_strided_slice %27 {offsets = [0, 270], sizes = [8, 16], strides = [1, 1]} : vector<8x384xf32> to vector<8x16xf32>
    %c0_53 = arith.constant 0 : index
    %c0_54 = arith.constant 0 : index
    %c240 = arith.constant 240 : index
    %89 = vector.load %arg4[%c0_53, %c0_54, %c240] : memref<1x8x256xf32, #tpu.memory_space<vmem>>, vector<1x8x16xf32>
    %90 = vector.shape_cast %89 : vector<1x8x16xf32> to vector<8x16xf32>
    %91 = vector.shape_cast %88 : vector<8x16xf32> to vector<1x8x16xf32>
    tpu.vector_store %arg4[%c0_53, %c0_54, %c240], %91 {strides = array<i32>} : memref<1x8x256xf32, #tpu.memory_space<vmem>>, vector<1x8x16xf32>,
    return
  }
  func.func @transform_0(%arg0: i32) -> (i32, i32) {
    %c0_i32 = arith.constant 0 : i32
    %c0_i32_0 = arith.constant 0 : i32
    %c0_i32_1 = arith.constant 0 : i32
    return %c0_i32, %c0_i32_0 : i32, i32
  }
  func.func @transform_1(%arg0: i32) -> (i32, i32) {
    %c0_i32 = arith.constant 0 : i32
    %c0_i32_0 = arith.constant 0 : i32
    %c0_i32_1 = arith.constant 0 : i32
    return %c0_i32, %c0_i32_0 : i32, i32
  }
  func.func @transform_2(%arg0: i32) -> (i32, i32, i32) {
    %c0_i32 = arith.constant 0 : i32
    %c0_i32_0 = arith.constant 0 : i32
    %c0_i32_1 = arith.constant 0 : i32
    return %arg0, %c0_i32, %c0_i32_0 : i32, i32, i32
  }
  func.func @transform_3(%arg0: i32) -> (i32, i32, i32) {
    %c0_i32 = arith.constant 0 : i32
    %c0_i32_0 = arith.constant 0 : i32
    %c0_i32_1 = arith.constant 0 : i32
    return %arg0, %c0_i32, %c0_i32_0 : i32, i32, i32
  }
}

</mosaic_0001>

<llo_original>
// kernel: hard_binary_conv.1
$region0: #{hard_binary_conv.1}
  #allocation0 [shape = 'u32[]', space=smem, size = 0x4, offset = 0x4, fixed_abs, tag = 'smem constant byte address 0x4 - core index']
  #allocation1 [shape = 'u32[72,128]{1,0:T(1,128)}', space=vmem, size = 0x9000, scoped, tag = 'internal scratch']
  #allocation2 [shape = 'bf16[48,384]{1,0:T(8,128)(2,1)}', space=vmem, size = 0x9000, scoped, tag = 'scratch operand']
  %s0 = inlined_call_operand.vmem [shape: bf16[8,48], index: 0, kind: input, shape index: {}]
  %s1 = inlined_call_operand.vmem [shape: f32[8,1], index: 1, kind: input, shape index: {}]
  %s2 = inlined_call_operand.vmem [shape: bf16[2,4,512], index: 2, kind: input, shape index: {}]
  %s3 = inlined_call_operand.vmem [shape: f32[2,8,256], index: 3, kind: output, shape index: {}]
  %s4 = sld [smem:[#allocation0]]
  $region45: #{hard_binary_conv.1} parent=0
    _
  %s6 = ssub.s32 1, %s4
  %s7 = scalar_select 0, %s6, %s4
  loop: start=0, step=1, limit=4
  $region2: #{hard_binary_conv.1} parent=0 // loop_pre_header
    _
  $region3: #{hard_binary_conv.1} parent=0 // loop_header
    %s9 = sphi 0, %s13
    %p10 = scmp.ge.s32.totalorder %s9, 4
    %s17 = sphi 0, %s17
    %s19 = sphi 0, %s17
    %s20 = sphi 0, %s19
    %s34 = sphi 0, %s20
    %s38 = sphi 0, %s38
    %s40 = sphi 0, %s38
    %s41 = sphi 0, %s40
    %s55 = sphi 0, %s41
    %s61 = sphi 0, %s63
    %s64 = sphi 0, %s61
    %s65 = sphi 0, %s64
    %s81 = sphi 0, %s65
    %s87 = sphi 0, %s89
    %s90 = sphi 0, %s87
    %s91 = sphi 0, %s90
    %s107 = sphi 0, %s91
  $region4: #{hard_binary_conv.1} parent=0 // loop_header_branch
    %12 = sbr.rel (%p10) target = $region8
  $region5: #{hard_binary_conv.1} parent=0 // loop_body
    %s14 = ssub.s32 %s9, 1
    %s15 = ssub.s32 %s9, 2
    %s16 = sadd.s32 %s9, 1
    %s18 = sadd.s32 %s17, 1
    %p21 = scmp.eq.s32.totalorder %s9, 1
    %p22 = scmp.ne.s32.totalorder %s17, %s19
    %p23 = scmp.eq.s32.totalorder %s9, 0
    %p24 = por %p22, %p23
    %p25 = scmp.ne.s32.totalorder %s17, %s19
    %p26 = scmp.eq.s32.totalorder %s14, 1
    %p27 = por %p25, %p26
    %p28 = scmp.ne.s32.totalorder %s19, %s20
    %p29 = scmp.eq.s32.totalorder %s14, 0
    %p30 = por %p28, %p29
    %p31 = scmp.ne.s32.totalorder %s19, %s20
    %p32 = scmp.eq.s32.totalorder %s15, 1
    %p33 = por %p31, %p32
    %p35 = scmp.ne.s32.totalorder %s20, %s34
    %p36 = scmp.eq.s32.totalorder %s15, 0
    %p37 = por %p35, %p36
    %s39 = sadd.s32 %s38, 1
    %p42 = scmp.eq.s32.totalorder %s9, 1
    %p43 = scmp.ne.s32.totalorder %s38, %s40
    %p44 = scmp.eq.s32.totalorder %s9, 0
    %p45 = por %p43, %p44
    %p46 = scmp.ne.s32.totalorder %s38, %s40
    %p47 = scmp.eq.s32.totalorder %s14, 1
    %p48 = por %p46, %p47
    %p49 = scmp.ne.s32.totalorder %s40, %s41
    %p50 = scmp.eq.s32.totalorder %s14, 0
    %p51 = por %p49, %p50
    %p52 = scmp.ne.s32.totalorder %s40, %s41
    %p53 = scmp.eq.s32.totalorder %s15, 1
    %p54 = por %p52, %p53
    %p56 = scmp.ne.s32.totalorder %s41, %s55
    %p57 = scmp.eq.s32.totalorder %s15, 0
    %p58 = por %p56, %p57
    %s59 = ssub.s32 %s9, %s16
    %p60 = scmp.eq.s32.totalorder %s59, 0
    %s62 = sadd.s32 %s61, 1
    %s63 = scalar_select %p60, %s61, %s62
    %p66 = pneg %p60
    %p67 = scmp.eq.s32.totalorder %s9, 1
    %p68 = por %p66, %p67
    %p69 = scmp.ne.s32.totalorder %s61, %s64
    %p70 = scmp.eq.s32.totalorder %s9, 0
    %p71 = por %p69, %p70
    %p72 = scmp.ne.s32.totalorder %s61, %s64
    %p73 = scmp.eq.s32.totalorder %s14, 1
    %p74 = por %p72, %p73
    %p75 = scmp.ne.s32.totalorder %s64, %s65
    %p76 = scmp.eq.s32.totalorder %s14, 0
    %p77 = por %p75, %p76
    %p78 = scmp.ne.s32.totalorder %s64, %s65
    %p79 = scmp.eq.s32.totalorder %s15, 1
    %p80 = por %p78, %p79
    %p82 = scmp.ne.s32.totalorder %s65, %s81
    %p83 = scmp.eq.s32.totalorder %s15, 0
    %p84 = por %p82, %p83
    %s85 = ssub.s32 %s9, %s16
    %p86 = scmp.eq.s32.totalorder %s85, 0
    %s88 = sadd.s32 %s87, 1
    %s89 = scalar_select %p86, %s87, %s88
    %p92 = pneg %p86
    %p93 = scmp.eq.s32.totalorder %s9, 1
    %p94 = por %p92, %p93
    %p95 = scmp.ne.s32.totalorder %s87, %s90
    %p96 = scmp.eq.s32.totalorder %s9, 0
    %p97 = por %p95, %p96
    %p98 = scmp.ne.s32.totalorder %s87, %s90
    %p99 = scmp.eq.s32.totalorder %s14, 1
    %p100 = por %p98, %p99
    %p101 = scmp.ne.s32.totalorder %s90, %s91
    %p102 = scmp.eq.s32.totalorder %s14, 0
    %p103 = por %p101, %p102
    %p104 = scmp.ne.s32.totalorder %s90, %s91
    %p105 = scmp.eq.s32.totalorder %s15, 1
    %p106 = por %p104, %p105
    %p108 = scmp.ne.s32.totalorder %s91, %s107
    %p109 = scmp.eq.s32.totalorder %s15, 0
    %p110 = por %p108, %p109
    %p111 = scmp.le.s32.totalorder 1, %s9
    %p112 = scmp.lt.s32.totalorder %s9, 3
    %p113 = pnand %p111, %p112
    %p114 = pneg %p113
    // Predicated region
    $region9: #{hard_binary_conv.1} parent=5 // pred_check
      _
    $region10: #{hard_binary_conv.1} parent=5 // pred_check_branch
      %116 = sbr.rel (%p113) target = $region12
    $region11: #{hard_binary_conv.1} parent=5 // pred_region
      %s117 = ssub.s32 %s9, 1
      // Predicated region
      $region13: #{hard_binary_conv.1} parent=11 // pred_check
        %p118 = pneg %p30
      $region14: #{hard_binary_conv.1} parent=11 // pred_check_branch
        %120 = sbr.rel (%p118) target = $region16
      $region15: #{hard_binary_conv.1} parent=11 // pred_region
        _
      $region16: #{hard_binary_conv.1} parent=11 // pred_fallthru
        _
      // Predicated region
      $region17: #{hard_binary_conv.1} parent=11 // pred_check
        %p121 = pneg %p51
      $region18: #{hard_binary_conv.1} parent=11 // pred_check_branch
        %123 = sbr.rel (%p121) target = $region20
      $region19: #{hard_binary_conv.1} parent=11 // pred_region
        _
      $region20: #{hard_binary_conv.1} parent=11 // pred_fallthru
        _
    $region12: #{hard_binary_conv.1} parent=5 // pred_fallthru
      _
    %p124 = scmp.lt.s32.totalorder %s9, 2
    // Predicated region
    $region21: #{hard_binary_conv.1} parent=5 // pred_check
      %p125 = pneg %p124
    $region22: #{hard_binary_conv.1} parent=5 // pred_check_branch
      %127 = sbr.rel (%p125) target = $region24
    $region23: #{hard_binary_conv.1} parent=5 // pred_region
      // Predicated region
      $region25: #{hard_binary_conv.1} parent=23 // pred_check
        %p128 = pneg %p71
      $region26: #{hard_binary_conv.1} parent=23 // pred_check_branch
        %130 = sbr.rel (%p128) target = $region28
      $region27: #{hard_binary_conv.1} parent=23 // pred_region
        %p131 = scmp.lt.s32.totalorder %s9, 1
        %s132 = scalar_select %p131, %s9, 1
        %s133 = smul.addr %s132, 4
        %s134 = smul.addr %s133, 2
        %s135 = scalar_lea.vmem %s2, %s134
      $region28: #{hard_binary_conv.1} parent=23 // pred_fallthru
        _
    $region24: #{hard_binary_conv.1} parent=5 // pred_fallthru
      _
    %p136 = scmp.le.s32.totalorder 1, %s9
    %p137 = scmp.lt.s32.totalorder %s9, 3
    %p138 = pnand %p136, %p137
    %p139 = pneg %p138
    // Predicated region
    $region29: #{hard_binary_conv.1} parent=5 // pred_check
      _
    $region30: #{hard_binary_conv.1} parent=5 // pred_check_branch
      %141 = sbr.rel (%p138) target = $region32
    $region31: #{hard_binary_conv.1} parent=5 // pred_region
      %s142 = ssub.s32 %s9, 1
      %p143 = pneg %p30
      %p144 = pneg %p27
      %p145 = pneg %p51
      %p146 = pneg %p48
      %p147 = scmp.lt.s32.totalorder %s14, 1
      %s148 = scalar_select %p147, %s14, 1
      %s149 = smul.addr %s148, 4
      %s150 = smul.addr %s149, 2
      %s151 = scalar_lea.vmem %s2, %s150
      %p152 = pneg %p77
      %p153 = pneg %p74
      %p154 = pneg %p103
      %p155 = pneg %p100
      %p156 = scmp.lt.s32.totalorder %s14, 1
      %s157 = scalar_select %p156, %s14, 1
      %s158 = smul.addr %s157, 2
      %s159 = smul.addr %s158, 8
      %s160 = scalar_lea.vmem %s3, %s159
      %p161 = scmp.lt.s32.totalorder %s14, 1
      %s162 = scalar_select %p161, %s14, 1
      %s163 = smul.addr %s162, 4
      %s164 = smul.addr %s163, 2
      %s165 = scalar_lea.vmem %s2, %s164
      %p166 = scmp.lt.s32.totalorder %s14, 1
      %s167 = scalar_select %p166, %s14, 1
      %s168 = smul.addr %s167, 2
      %s169 = smul.addr %s168, 8
      %s170 = scalar_lea.vmem %s3, %s169
      %v172 = vld [vmem:[%s165] sm:$0xff]
      %173 = vst [vmem:[#allocation2 + $0x30] sm:$0xcc] 0
      %174 = vst [vmem:[#allocation2 + $0x38] sm:$0xc] 0
      %175 = vst [vmem:[#allocation2 + $0x3c] sm:$0xff] 0
      %176 = vst [vmem:[#allocation2 + $0x44] sm:$0xf] 0
      %178 = vst [vmem:[#allocation1] ss:$2 sm:$0xff] %v172
      %v179 = vld.sshfl [vmem:[#allocation1] sm:$0xff pattern:$0x75643120]
      %v180 = vld.sshfl [vmem:[#allocation1 + $0x8] sm:$0xff pattern:$0x75643120]
      %183 = vst [vmem:[#allocation2] sm:$0x33] %v179
      %184 = vst [vmem:[#allocation2 + $0x8] sm:$0x3] %v180
      %s185 = scalar_lea.vmem [#allocation1], 1
      %186 = vst [vmem:[%s185] ss:$2 sm:$0xff] %v172
      %v187 = vld.sshfl [vmem:[#allocation1] sm:$0xff pattern:$0x75643120]
      %v189 = vld.sshfl [vmem:[#allocation1 + $0x8] sm:$0xff pattern:$0x75643120]
      %191 = vrot.lane.b32.xlu0 %v187, 127
      %v192 = vpop.permute.xlu0 %191
      %193 = vrot.lane.b32.xlu0 %v189, 127
      %v194 = vpop.permute.xlu0 %193
      %v195 = vrot.slane %v192, 4
      %v196 = vrot.slane %v194, 4
      %vm197 = vcmask 1043456
      %v198 = vsel %vm197, %v195, %v196
      %vm199 = vcmask 1039360
      %v200 = vsel %vm199, %v192, %v198
      %v201 = vsel %vm199, %v194, %v196
      %204 = vst [vmem:[#allocation2] sm:$0xcc] %v200
      %205 = vst [vmem:[#allocation2 + $0x8] sm:$0xc] %v201
      %206 = vst [vmem:[#allocation1] ss:$2 sm:$0xff] %v172
      %v207 = vld.sshfl [vmem:[#allocation1] sm:$0xff pattern:$0x75643120]
      %v209 = vld.sshfl [vmem:[#allocation1 + $0x8] sm:$0xff pattern:$0x75643120]
      %211 = vrot.lane.b32.xlu0 %v207, 126
      %v212 = vpop.permute.xlu0 %211
      %213 = vrot.lane.b32.xlu0 %v209, 126
      %v214 = vpop.permute.xlu0 %213
      %v215 = vrot.slane %v212, 4
      %v216 = vrot.slane %v214, 4
      %v217 = vsel %vm197, %v215, %v216
      %vm218 = vcmask 1031168
      %v219 = vsel %vm218, %v212, %v217
      %v220 = vsel %vm218, %v214, %v216
      %223 = vst [vmem:[#allocation2 + $0xc] sm:$0x33] %v219
      %224 = vst [vmem:[#allocation2 + $0x14] sm:$0x3] %v220
      %s225 = scalar_lea.vmem [#allocation1], 1
      %226 = vst [vmem:[%s225] ss:$2 sm:$0xff] %v172
      %v227 = vld.sshfl [vmem:[#allocation1] sm:$0xff pattern:$0x75643120]
      %v229 = vld.sshfl [vmem:[#allocation1 + $0x8] sm:$0xff pattern:$0x75643120]
      %231 = vrot.lane.b32.xlu0 %v227, 110
      %v232 = vpop.permute.xlu0 %231
      %233 = vrot.lane.b32.xlu0 %v229, 110
      %v234 = vpop.permute.xlu0 %233
      %v235 = vrot.slane %v232, 4
      %v236 = vrot.slane %v234, 4
      %v237 = vsel %vm197, %v235, %v236
      %vm238 = vcmask 900096
      %v239 = vsel %vm238, %v232, %v237
      %v240 = vsel %vm238, %v234, %v236
      %243 = vst [vmem:[#allocation2 + $0xc] sm:$0xcc] %v239
      %244 = vst [vmem:[#allocation2 + $0x14] sm:$0xc] %v240
      %245 = vst [vmem:[#allocation1] ss:$2 sm:$0xff] %v172
      %v246 = vld.sshfl [vmem:[#allocation1] sm:$0xff pattern:$0x75643120]
      %v248 = vld.sshfl [vmem:[#allocation1 + $0x8] sm:$0xff pattern:$0x75643120]
      %250 = vrot.lane.b32.xlu0 %v246, 109
      %v251 = vpop.permute.xlu0 %250
      %252 = vrot.lane.b32.xlu0 %v248, 109
      %v253 = vpop.permute.xlu0 %252
      %v254 = vrot.slane %v251, 4
      %v255 = vrot.slane %v253, 4
      %v256 = vsel %vm197, %v254, %v255
      %vm257 = vcmask 891904
      %v258 = vsel %vm257, %v251, %v256
      %v259 = vsel %vm257, %v253, %v255
      %262 = vst [vmem:[#allocation2 + $0x18] sm:$0x33] %v258
      %263 = vst [vmem:[#allocation2 + $0x20] sm:$0x3] %v259
      %s264 = scalar_lea.vmem [#allocation1], 1
      %265 = vst [vmem:[%s264] ss:$2 sm:$0xff] %v172
      %v266 = vld.sshfl [vmem:[#allocation1] sm:$0xff pattern:$0x75643120]
      %v268 = vld.sshfl [vmem:[#allocation1 + $0x8] sm:$0xff pattern:$0x75643120]
      %270 = vrot.lane.b32.xlu0 %v266, 108
      %v271 = vpop.permute.xlu0 %270
      %272 = vrot.lane.b32.xlu0 %v268, 108
      %v273 = vpop.permute.xlu0 %272
      %v274 = vrot.slane %v271, 4
      %v275 = vrot.slane %v273, 4
      %v276 = vsel %vm197, %v274, %v275
      %vm277 = vcmask 883712
      %v278 = vsel %vm277, %v271, %v276
      %v279 = vsel %vm277, %v273, %v275
      %282 = vst [vmem:[#allocation2 + $0x18] sm:$0xcc] %v278
      %283 = vst [vmem:[#allocation2 + $0x20] sm:$0xc] %v279
      %284 = vst [vmem:[#allocation1] ss:$2 sm:$0xff] %v172
      %v285 = vld.sshfl [vmem:[#allocation1] sm:$0xff pattern:$0x75643120]
      %v287 = vld.sshfl [vmem:[#allocation1 + $0x8] sm:$0xff pattern:$0x75643120]
      %289 = vrot.lane.b32.xlu0 %v285, 92
      %v290 = vpop.permute.xlu0 %289
      %291 = vrot.lane.b32.xlu0 %v287, 92
      %v292 = vpop.permute.xlu0 %291
      %v293 = vrot.slane %v290, 4
      %v294 = vrot.slane %v292, 4
      %v295 = vsel %vm197, %v293, %v294
      %vm296 = vcmask 752640
      %v297 = vsel %vm296, %v290, %v295
      %v298 = vsel %vm296, %v292, %v294
      %301 = vst [vmem:[#allocation2 + $0x24] sm:$0x33] %v297
      %302 = vst [vmem:[#allocation2 + $0x2c] sm:$0x3] %v298
      %s303 = scalar_lea.vmem [#allocation1], 1
      %304 = vst [vmem:[%s303] ss:$2 sm:$0xff] %v172
      %v305 = vld.sshfl [vmem:[#allocation1] sm:$0xff pattern:$0x75643120]
      %v307 = vld.sshfl [vmem:[#allocation1 + $0x8] sm:$0xff pattern:$0x75643120]
      %309 = vrot.lane.b32.xlu0 %v305, 91
      %v310 = vpop.permute.xlu0 %309
      %311 = vrot.lane.b32.xlu0 %v307, 91
      %v312 = vpop.permute.xlu0 %311
      %v313 = vrot.slane %v310, 4
      %v314 = vrot.slane %v312, 4
      %v315 = vsel %vm197, %v313, %v314
      %vm316 = vcmask 744448
      %v317 = vsel %vm316, %v310, %v315
      %v318 = vsel %vm316, %v312, %v314
      %321 = vst [vmem:[#allocation2 + $0x24] sm:$0xcc] %v317
      %322 = vst [vmem:[#allocation2 + $0x2c] sm:$0xc] %v318
      %323 = vst [vmem:[#allocation1] ss:$2 sm:$0xff] %v172
      %v324 = vld.sshfl [vmem:[#allocation1] sm:$0xff pattern:$0x75643120]
      %v326 = vld.sshfl [vmem:[#allocation1 + $0x8] sm:$0xff pattern:$0x75643120]
      %328 = vrot.lane.b32.xlu0 %v324, 90
      %v329 = vpop.permute.xlu0 %328
      %330 = vrot.lane.b32.xlu0 %v326, 90
      %v331 = vpop.permute.xlu0 %330
      %v332 = vrot.slane %v329, 4
      %v333 = vrot.slane %v331, 4
      %v334 = vsel %vm197, %v332, %v333
      %vm335 = vcmask 736256
      %v336 = vsel %vm335, %v329, %v334
      %v337 = vsel %vm335, %v331, %v333
      %340 = vst [vmem:[#allocation2 + $0x30] sm:$0x33] %v336
      %341 = vst [vmem:[#allocation2 + $0x38] sm:$0x3] %v337
      %v342 = vld [vmem:[%s0] sm:$0xf]
      %v343 = vld [vmem:[#allocation2] sm:$0xff]
      %v344 = vld [vmem:[#allocation2 + $0x8] sm:$0xf]
      %v345 = vld [vmem:[#allocation2 + $0xc] sm:$0xff]
      %v346 = vld [vmem:[#allocation2 + $0x14] sm:$0xf]
      %v347 = vld [vmem:[#allocation2 + $0x18] sm:$0xff]
      %v348 = vld [vmem:[#allocation2 + $0x20] sm:$0xf]
      %v349 = vld [vmem:[#allocation2 + $0x24] sm:$0xff]
      %v350 = vld [vmem:[#allocation2 + $0x2c] sm:$0xf]
      %v351 = vld [vmem:[#allocation2 + $0x30] sm:$0xff]
      %v352 = vld [vmem:[#allocation2 + $0x38] sm:$0xf]
      %v353 = vld [vmem:[#allocation2 + $0x3c] sm:$0xff]
      %v354 = vld [vmem:[#allocation2 + $0x44] sm:$0xf]
      %v367 = vunpack.c.l.b16 %v343
      %v368 = vunpack.c.h.b16 %v343
      %v369 = vunpack.c.l.b16 %v344
      %v370 = vunpack.c.l.b16 %v345
      %v371 = vunpack.c.h.b16 %v345
      %v372 = vunpack.c.l.b16 %v346
      %v373 = vunpack.c.l.b16 %v347
      %v374 = vunpack.c.h.b16 %v347
      %v375 = vunpack.c.l.b16 %v348
      %v376 = vunpack.c.l.b16 %v349
      %v377 = vunpack.c.h.b16 %v349
      %v378 = vunpack.c.l.b16 %v350
      %v379 = vunpack.c.l.b16 %v351
      %v380 = vunpack.c.h.b16 %v351
      %v381 = vunpack.c.l.b16 %v352
      %v382 = vunpack.c.l.b16 %v353
      %v383 = vunpack.c.h.b16 %v353
      %v384 = vunpack.c.l.b16 %v354
      %v385 = vpack.c.b16 %v370, %v367
      %v386 = vpack.c.b16 %v371, %v368
      %v387 = vpack.c.b16 %v372, %v369
      %v388 = vpack.c.b16 %v376, %v373
      %v389 = vpack.c.b16 %v377, %v374
      %v390 = vpack.c.b16 %v378, %v375
      %v391 = vpack.c.b16 %v382, %v379
      %v392 = vpack.c.b16 %v383, %v380
      %v393 = vpack.c.b16 %v384, %v381
      %vm403 = vcmask 392192
      %v405 = vsel %vm403, %v342, 0
      %407 = vmatpush.bf16.msra.mxu0 0
      %408 = vmatpush.bf16.msra.mxu0 0
      %409 = vmatpush.bf16.msra.mxu0 0
      %410 = vmatpush.bf16.msra.mxu0 0
      %411 = vmatpush.bf16.msra.mxu0 0
      %412 = vmatpush.bf16.msra.mxu0 %v391
      %413 = vmatpush.bf16.msra.mxu0 %v388
      %414 = vmatpush.bf16.msra.mxu0 %v385
      %415 = vmatmul.bf16.gmra.mxu0 %v405
      %v416 = vpop.f32.mrf.mxu0
      %v417 = vadd.f32 0.0, %v416
      %v418 = vpop.f32.mrf.mxu0
      %419 = vdwg.mxu0
      %420 = vmatpush.bf16.msra.mxu0 0
      %421 = vmatpush.bf16.msra.mxu0 0
      %422 = vmatpush.bf16.msra.mxu0 0
      %423 = vmatpush.bf16.msra.mxu0 0
      %424 = vmatpush.bf16.msra.mxu0 0
      %425 = vmatpush.bf16.msra.mxu0 %v392
      %426 = vmatpush.bf16.msra.mxu0 %v389
      %427 = vmatpush.bf16.msra.mxu0 %v386
      %428 = vmatmul.bf16.gmra.mxu0 %v405
      %v429 = vpop.f32.mrf.mxu0
      %v430 = vadd.f32 0.0, %v429
      %v431 = vpop.f32.mrf.mxu0
      %432 = vdwg.mxu0
      %433 = vmatpush.bf16.msra.mxu0 0
      %434 = vmatpush.bf16.msra.mxu0 0
      %435 = vmatpush.bf16.msra.mxu0 0
      %436 = vmatpush.bf16.msra.mxu0 0
      %437 = vmatpush.bf16.msra.mxu0 0
      %438 = vmatpush.bf16.msra.mxu0 %v393
      %439 = vmatpush.bf16.msra.mxu0 %v390
      %440 = vmatpush.bf16.msra.mxu0 %v387
      %441 = vmatmul.bf16.gmra.mxu0 %v405
      %v442 = vpop.f32.mrf.mxu0
      %v443 = vadd.f32 0.0, %v442
      %v444 = vpop.f32.mrf.mxu0
      %445 = vdwg.mxu0
      %v446 = vld [vmem:[%s1] sm:$0xff]
      %448 = vset.pattern.permute.xlu0 0
      %449 = vperm.xlu0 %448, %v446
      %v450 = vpop.permute.xlu0 %449
      %v452 = vmul.f32 %v417, %v450
      %v453 = vmul.f32 %v430, %v450
      %v454 = vmul.f32 %v443, %v450
      %vm455 = vcmask 130048
      %456 = vst.msk [vmem:[%s170] sm:$0xff] %vm455, %v452
      %458 = vrot.lane.b32.xlu0 %v452, 126
      %v459 = vpop.permute.xlu0 %458
      %vm461 = vcmask 261248
      %462 = vst.msk [vmem:[%s170] sm:$0xff] %vm461, %v459
      %463 = vrot.lane.b32.xlu0 %v452, 124
      %v464 = vpop.permute.xlu0 %463
      %vm466 = vcmask 392448
      %467 = vst.msk [vmem:[%s170] sm:$0xff] %vm466, %v464
      %468 = vrot.lane.b32.xlu0 %v452, 122
      %v469 = vpop.permute.xlu0 %468
      %vm471 = vcmask 523648
      %472 = vst.msk [vmem:[%s170] sm:$0xff] %vm471, %v469
      %473 = vrot.lane.b32.xlu0 %v452, 120
      %v474 = vpop.permute.xlu0 %473
      %vm476 = vcmask 654848
      %477 = vst.msk [vmem:[%s170] sm:$0xff] %vm476, %v474
      %478 = vrot.lane.b32.xlu0 %v452, 118
      %v479 = vpop.permute.xlu0 %478
      %vm481 = vcmask 786048
      %482 = vst.msk [vmem:[%s170] sm:$0xff] %vm481, %v479
      %483 = vrot.lane.b32.xlu0 %v452, 116
      %v484 = vpop.permute.xlu0 %483
      %vm486 = vcmask 917248
      %487 = vst.msk [vmem:[%s170] sm:$0xff] %vm486, %v484
      %489 = vrot.lane.b32.xlu0 %v452, 114
      %v490 = vpop.permute.xlu0 %489
      %491 = vrot.lane.b32.xlu0 %v453, 114
      %v492 = vpop.permute.xlu0 %491
      %vm493 = vcmask 932864
      %v494 = vsel %vm493, %v490, %v492
      %vm496 = vcmask 1048448
      %497 = vst.msk [vmem:[%s170] sm:$0xff] %vm496, %v494
      %498 = vrot.lane.b32.xlu0 %v453, 112
      %v499 = vpop.permute.xlu0 %498
      %501 = vst.msk [vmem:[%s170 + $0x8] sm:$0xff] %vm455, %v499
      %502 = vrot.lane.b32.xlu0 %v453, 110
      %v503 = vpop.permute.xlu0 %502
      %505 = vst.msk [vmem:[%s170 + $0x8] sm:$0xff] %vm461, %v503
      %506 = vrot.lane.b32.xlu0 %v453, 108
      %v507 = vpop.permute.xlu0 %506
      %509 = vst.msk [vmem:[%s170 + $0x8] sm:$0xff] %vm466, %v507
      %510 = vrot.lane.b32.xlu0 %v453, 106
      %v511 = vpop.permute.xlu0 %510
      %513 = vst.msk [vmem:[%s170 + $0x8] sm:$0xff] %vm471, %v511
      %514 = vrot.lane.b32.xlu0 %v453, 104
      %v515 = vpop.permute.xlu0 %514
      %517 = vst.msk [vmem:[%s170 + $0x8] sm:$0xff] %vm476, %v515
      %518 = vrot.lane.b32.xlu0 %v453, 102
      %v519 = vpop.permute.xlu0 %518
      %521 = vst.msk [vmem:[%s170 + $0x8] sm:$0xff] %vm481, %v519
      %523 = vrot.lane.b32.xlu0 %v453, 100
      %v524 = vpop.permute.xlu0 %523
      %525 = vrot.lane.b32.xlu0 %v454, 100
      %v526 = vpop.permute.xlu0 %525
      %vm527 = vcmask 818176
      %v528 = vsel %vm527, %v524, %v526
      %530 = vst.msk [vmem:[%s170 + $0x8] sm:$0xff] %vm486, %v528
      %531 = vrot.lane.b32.xlu0 %v454, 98
      %v532 = vpop.permute.xlu0 %531
      %534 = vst.msk [vmem:[%s170 + $0x8] sm:$0xff] %vm496, %v532
      %p535 = scmp.lt.s32.totalorder %s14, 1
      %s536 = scalar_select %p535, %s14, 1
      %s537 = smul.addr %s536, 2
      %s538 = smul.addr %s537, 8
      %s539 = scalar_lea.vmem %s3, %s538
      // Predicated region
      $region33: #{hard_binary_conv.1} parent=31 // pred_check
        %p540 = pneg %p100
      $region34: #{hard_binary_conv.1} parent=31 // pred_check_branch
        %542 = sbr.rel (%p540) target = $region36
      $region35: #{hard_binary_conv.1} parent=31 // pred_region
        _
      $region36: #{hard_binary_conv.1} parent=31 // pred_fallthru
        _
    $region32: #{hard_binary_conv.1} parent=5 // pred_fallthru
      _
    %p543 = scmp.le.s32.totalorder 2, %s9
    // Predicated region
    $region37: #{hard_binary_conv.1} parent=5 // pred_check
      %p544 = pneg %p543
    $region38: #{hard_binary_conv.1} parent=5 // pred_check_branch
      %546 = sbr.rel (%p544) target = $region40
    $region39: #{hard_binary_conv.1} parent=5 // pred_region
      %s547 = ssub.s32 %s9, 2
      // Predicated region
      $region41: #{hard_binary_conv.1} parent=39 // pred_check
        %p548 = pneg %p106
      $region42: #{hard_binary_conv.1} parent=39 // pred_check_branch
        %550 = sbr.rel (%p548) target = $region44
      $region43: #{hard_binary_conv.1} parent=39 // pred_region
        %p551 = scmp.lt.s32.totalorder %s15, 1
        %s552 = scalar_select %p551, %s15, 1
        %s553 = smul.addr %s552, 2
        %s554 = smul.addr %s553, 8
        %s555 = scalar_lea.vmem %s3, %s554
      $region44: #{hard_binary_conv.1} parent=39 // pred_fallthru
        _
    $region40: #{hard_binary_conv.1} parent=5 // pred_fallthru
      _
  $region6: #{hard_binary_conv.1} parent=0 // loop_footer
    %s13 = sadd.s32 1, %s9
  $region7: #{hard_binary_conv.1} parent=0 // loop_footer_branch
    %8 = sbr.rel target = $region3
  $region8: #{hard_binary_conv.1} parent=0 // loop_exit
    _

</llo_original>
